<compile_context>
chip_gen: v5e
topology: v5e:2x2
jax: 0.10.0
libtpu: 0.0.40
codegen_flags: <defaults>
</compile_context>

<pallas_src>
import jax
import jax.numpy as jnp
from jax.experimental import pallas as pl
from jax.experimental.pallas import tpu as pltpu

NEG_SLOPE = 0.2


def _leaky(x):
    # LeakyReLU(0.2); since slope < 1, max(x, slope*x) is exact.
    return jnp.maximum(x, NEG_SLOPE * x)


def pixel_disc_kernel(x_ref, w1_ref, b1_ref, w2_ref, t2_ref, w3_ref, t3_ref,
                      o_ref):
    # Layout: channels on sublanes, pixels on lanes.
    #   x_ref  : (1, Cin, TP) f32   (one image's channel slab)
    #   w1_ref : (F0, Cin) bf16      b1_ref : (F0, 1) f32
    #   w2_ref : (F1, F0)  bf16      t2_ref : (F1, 1) f32   (BN folded)
    #   w3_ref : (1, F1)   bf16      t3_ref : (1, 1)  f32 in SMEM (BN folded)
    #   o_ref  : (1, 1, TP) f32
    x = x_ref[0].astype(jnp.bfloat16)                         # (Cin, TP)

    # layer 1: 1x1 conv (bias) + LeakyReLU(0.2)               (F0, TP)
    h1 = jnp.dot(w1_ref[...], x, preferred_element_type=jnp.float32)
    h1 = _leaky(h1 + b1_ref[...])

    # layer 2: 1x1 conv (no bias) + BN(eval, folded) + LeakyReLU(0.2)  (F1, TP)
    h2 = jnp.dot(w2_ref[...], h1.astype(jnp.bfloat16),
                 preferred_element_type=jnp.float32)
    h2 = _leaky(h2 + t2_ref[...])

    # layer 3: (F1 -> 1) projection on the (otherwise slack) MXU instead of a
    # VPU multiply + sublane reduce; the remaining epilogue on (1, TP) is tiny.
    y = jnp.dot(w3_ref[...], h2.astype(jnp.bfloat16),
                preferred_element_type=jnp.float32)           # (1, TP)
    y = _leaky(y + t3_ref[0, 0])
    o_ref[...] = y[None].astype(o_ref.dtype)


def _round_up(x, m):
    return ((x + m - 1) // m) * m


def pixel_discriminator(x_nchw, params, *, tile_p=8192):
    """x_nchw: (N, C, H, W) float32. Returns (N, 1, H, W) float32."""
    N, C, H, W = x_nchw.shape
    HW = H * W
    P = N * HW

    w1, b1, w2, s2, t2, w3, s3, t3 = params
    F0 = w1.shape[1]
    F1 = w2.shape[1]

    # Fold eval-mode BN scales into conv weights; channels-major layout with
    # matmul operands in bf16 (f32 accumulation inside the kernel).
    w1_t = jnp.asarray(w1.T, jnp.bfloat16)           # (F0, Cin)
    b1_c = jnp.asarray(b1.T, jnp.float32)            # (F0, 1)
    w2_t = jnp.asarray((w2 * s2).T, jnp.bfloat16)    # (F1, F0)
    t2_c = jnp.asarray(t2.T, jnp.float32)            # (F1, 1)
    w3_r = jnp.asarray((w3 * s3).T, jnp.bfloat16)    # (1, F1)
    t3_c = jnp.asarray(t3, jnp.float32)              # (1, 1) -> SMEM scalar

    # NCHW -> (N, C, HW): free reshape, no HBM transpose pass.
    x_r = x_nchw.reshape(N, C, HW)

    # Pixel tile: large (amortizes per-step overhead), multiple of 128, capped
    # at the per-image pixel count.  With a single image, cap at ~HW/2 so the
    # parallel grid still has >=2 steps (both v7x TensorCores get work).
    tp = min(_round_up(max(tile_p, 128), 128), _round_up(HW, 128))
    if N == 1:
        tp = min(tp, max(128, _round_up(-(-HW // 2), 128)))
    n_tiles = -(-HW // tp)
    hw_pad = n_tiles * tp
    if hw_pad != HW:
        # Only the trailing < tp pixels per image are padded (sliced off below).
        x_r = jnp.pad(x_r, ((0, 0), (0, 0), (0, hw_pad - HW)))

    grid = (N, n_tiles)
    full = lambda shape: pl.BlockSpec(shape, lambda n, i: (0, 0))

    cost = pl.CostEstimate(
        flops=2 * P * (C * F0 + F0 * F1 + F1),
        transcendentals=0,
        bytes_accessed=P * C * 4 + P * 4
        + 4 * (w1_t.size + b1_c.size + w2_t.size + t2_c.size + w3_r.size + 1),
    )

    out = pl.pallas_call(
        pixel_disc_kernel,
        out_shape=jax.ShapeDtypeStruct((N, 1, hw_pad), jnp.float32),
        grid_spec=pltpu.PrefetchScalarGridSpec(
            num_scalar_prefetch=0,
            grid=grid,
            in_specs=[
                pl.BlockSpec((1, C, tp), lambda n, i: (n, 0, i)),   # x slab
                full((F0, C)),                                      # w1^T
                full((F0, 1)),                                      # b1
                full((F1, F0)),                                     # (w2*s2)^T
                full((F1, 1)),                                      # t2
                full((1, F1)),                                      # (w3*s3)^T
                pl.BlockSpec(memory_space=pltpu.MemorySpace.SMEM),  # t3 scalar
            ],
            out_specs=pl.BlockSpec((1, 1, tp), lambda n, i: (n, 0, i)),
        ),
        compiler_params=pltpu.CompilerParams(
            dimension_semantics=("parallel", "parallel"),
            vmem_limit_bytes=48 * 1024 * 1024,
        ),
        cost_estimate=cost,
    )(x_r, w1_t, b1_c, w2_t, t2_c, w3_r, t3_c)

    # (N, 1, HW_pad) -> (N, 1, H, W)
    return out[:, :, :HW].reshape(N, 1, H, W)


def init_params(key, in_channel, feat0=64):
    """Deterministic synthetic parameters (shapes match the PyTorch module)."""
    eps = 1e-5
    ks = jax.random.split(key, 9)
    # Conv weights stored as (Cin, Cout); PyTorch's (Cout, Cin, 1, 1) is the
    # transpose of this.
    w1 = jax.random.normal(ks[0], (in_channel, feat0), jnp.float32) * 0.1
    b1 = jax.random.normal(ks[1], (1, feat0), jnp.float32) * 0.1
    w2 = jax.random.normal(ks[2], (feat0, feat0 * 2), jnp.float32) * 0.1
    w3 = jax.random.normal(ks[3], (feat0 * 2, 1), jnp.float32) * 0.1

    # BatchNorm (eval mode) params for layers 2 and 3, folded to affine.
    def bn_affine(kg, kb, km, kv, c):
        gamma = 1.0 + 0.1 * jax.random.normal(kg, (1, c), jnp.float32)
        beta = 0.1 * jax.random.normal(kb, (1, c), jnp.float32)
        mean = 0.1 * jax.random.normal(km, (1, c), jnp.float32)
        var = jnp.abs(1.0 + 0.1 * jax.random.normal(kv, (1, c), jnp.float32))
        scale = gamma / jnp.sqrt(var + eps)
        shift = beta - mean * scale
        return scale, shift

    s2, t2 = bn_affine(ks[4], ks[5], ks[6], ks[7], feat0 * 2)
    kk = jax.random.split(ks[8], 4)
    s3, t3 = bn_affine(kk[0], kk[1], kk[2], kk[3], 1)
    return (w1, b1, w2, s2, t2, w3, s3, t3)


def reference_forward(x_nchw, params):
    """Pure-JAX f32 reference (same math, NHWC channel matmuls)."""
    w1, b1, w2, s2, t2, w3, s3, t3 = params
    x = jnp.transpose(x_nchw, (0, 2, 3, 1))                  # NHWC
    h1 = _leaky(jnp.einsum("nhwc,cf->nhwf", x, w1) + b1[0])
    h2 = _leaky(jnp.einsum("nhwc,cf->nhwf", h1, w2) * s2[0] + t2[0])
    h3 = _leaky(jnp.einsum("nhwc,cf->nhwf", h2, w3) * s3[0] + t3[0])
    return jnp.transpose(h3, (0, 3, 1, 2))                   # NCHW


if __name__ == "__main__":
    key = jax.random.PRNGKey(0)
    kx, kp, kx2 = jax.random.split(key, 3)

    N, C, H, W = 2, 4, 16, 16
    x = jax.random.normal(kx, (N, C, H, W), jnp.float32)
    params = init_params(kp, in_channel=C, feat0=64)

    ref = reference_forward(x, params)

    # Single HW-tile per image (default tile covers all 256 pixels), grid (2,1).
    out = jax.block_until_ready(pixel_discriminator(x, params))
    assert out.shape == (N, 1, H, W), out.shape
    # bf16 matmul inputs (f32 accumulate) -> loosened tolerance vs f32 ref.
    assert jnp.allclose(out, ref, atol=3e-2, rtol=3e-2), "mismatch (single tile)"

    # Multi-tile path: 2 images x 2 tiles of 128 pixels, grid (2,2).
    out_mt = jax.block_until_ready(pixel_discriminator(x, params, tile_p=128))
    assert jnp.allclose(out_mt, ref, atol=3e-2, rtol=3e-2), "mismatch (multi tile)"

    # Padded path (HW = 120 pixels, padded to 128), grid (1,1).
    x2 = jax.random.normal(kx2, (1, C, 10, 12), jnp.float32)
    ref2 = reference_forward(x2, params)
    out2 = jax.block_until_ready(pixel_discriminator(x2, params))
    assert out2.shape == (1, 1, 10, 12), out2.shape
    assert jnp.allclose(out2, ref2, atol=3e-2, rtol=3e-2), "mismatch (padded)"

    print("KERNEL_OK")
</pallas_src>

<mosaic_0001>
module attributes {stable_mosaic.version = 11 : i64} {
  func.func @pixel_disc_kernel(%arg0: i32, %arg1: i32, %arg2: memref<1x4x256xf32, #tpu.memory_space<vmem>>, %arg3: memref<64x4xbf16, #tpu.memory_space<vmem>>, %arg4: memref<64x1xf32, #tpu.memory_space<vmem>>, %arg5: memref<128x64xbf16, #tpu.memory_space<vmem>>, %arg6: memref<128x1xf32, #tpu.memory_space<vmem>>, %arg7: memref<1x128xbf16, #tpu.memory_space<vmem>>, %arg8: memref<1x1xf32, #tpu.memory_space<smem>>, %arg9: memref<1x1x256xf32, #tpu.memory_space<vmem>>) attributes {dimension_semantics = [#tpu.dimension_semantics<parallel>, #tpu.dimension_semantics<parallel>], iteration_bounds = array<i64: 2, 1>, scalar_prefetch = 0 : i64, scratch_operands = 0 : i64, tpu.core_type = #tpu.core_type<tc>, window_params = [{transform_indices = @transform_0, window_bounds = array<i64: 1, 4, 256>}, {pipeline_mode = #tpu.pipeline_mode<synchronous>, transform_indices = @transform_1, window_bounds = array<i64: 64, 4>}, {pipeline_mode = #tpu.pipeline_mode<synchronous>, transform_indices = @transform_2, window_bounds = array<i64: 64, 1>}, {pipeline_mode = #tpu.pipeline_mode<synchronous>, transform_indices = @transform_3, window_bounds = array<i64: 128, 64>}, {pipeline_mode = #tpu.pipeline_mode<synchronous>, transform_indices = @transform_4, window_bounds = array<i64: 128, 1>}, {pipeline_mode = #tpu.pipeline_mode<synchronous>, transform_indices = @transform_5, window_bounds = array<i64: 1, 128>}, {transform_indices = @transform_6, window_bounds = array<i64: 1, 1>}, {transform_indices = @transform_7, window_bounds = array<i64: 1, 1, 256>}]} {
    %c0 = arith.constant 0 : index
    %c0_0 = arith.constant 0 : index
    %c0_1 = arith.constant 0 : index
    %0 = vector.load %arg2[%c0, %c0_0, %c0_1] : memref<1x4x256xf32, #tpu.memory_space<vmem>>, vector<1x4x256xf32>
    %1 = vector.shape_cast %0 : vector<1x4x256xf32> to vector<4x256xf32>
    %2 = arith.truncf %1 : vector<4x256xf32> to vector<4x256xbf16>
    %c0_2 = arith.constant 0 : index
    %c0_3 = arith.constant 0 : index
    %3 = vector.load %arg3[%c0_2, %c0_3] : memref<64x4xbf16, #tpu.memory_space<vmem>>, vector<64x4xbf16>
    %cst = arith.constant dense<0.000000e+00> : vector<64x256xf32>
    %4 = tpu.matmul %3, %2, %cst {dimension_numbers = #tpu.dot_dimension_numbers<[1], [0], [0], [1], [0, 0, 1, 1], [], []>} : vector<64x4xbf16>, vector<4x256xbf16>, vector<64x256xf32> -> vector<64x256xf32>
    %c0_4 = arith.constant 0 : index
    %c0_5 = arith.constant 0 : index
    %5 = vector.load %arg4[%c0_4, %c0_5] : memref<64x1xf32, #tpu.memory_space<vmem>>, vector<64x1xf32>
    %6 = vector.broadcast %5 : vector<64x1xf32> to vector<64x256xf32>
    %7 = arith.addf %4, %6 : vector<64x256xf32>
    %cst_6 = arith.constant 2.000000e-01 : f32
    %8 = vector.broadcast %cst_6 : f32 to vector<64x256xf32>
    %9 = arith.mulf %8, %7 : vector<64x256xf32>
    %10 = arith.maximumf %7, %9 : vector<64x256xf32>
    %c0_7 = arith.constant 0 : index
    %c0_8 = arith.constant 0 : index
    %11 = vector.load %arg5[%c0_7, %c0_8] : memref<128x64xbf16, #tpu.memory_space<vmem>>, vector<128x64xbf16>
    %12 = arith.truncf %10 : vector<64x256xf32> to vector<64x256xbf16>
    %cst_9 = arith.constant dense<0.000000e+00> : vector<128x256xf32>
    %13 = tpu.matmul %11, %12, %cst_9 {dimension_numbers = #tpu.dot_dimension_numbers<[1], [0], [0], [1], [0, 0, 1, 1], [], []>} : vector<128x64xbf16>, vector<64x256xbf16>, vector<128x256xf32> -> vector<128x256xf32>
    %c0_10 = arith.constant 0 : index
    %c0_11 = arith.constant 0 : index
    %14 = vector.load %arg6[%c0_10, %c0_11] : memref<128x1xf32, #tpu.memory_space<vmem>>, vector<128x1xf32>
    %15 = vector.broadcast %14 : vector<128x1xf32> to vector<128x256xf32>
    %16 = arith.addf %13, %15 : vector<128x256xf32>
    %cst_12 = arith.constant 2.000000e-01 : f32
    %17 = vector.broadcast %cst_12 : f32 to vector<128x256xf32>
    %18 = arith.mulf %17, %16 : vector<128x256xf32>
    %19 = arith.maximumf %16, %18 : vector<128x256xf32>
    %c0_13 = arith.constant 0 : index
    %c0_14 = arith.constant 0 : index
    %20 = vector.load %arg7[%c0_13, %c0_14] : memref<1x128xbf16, #tpu.memory_space<vmem>>, vector<1x128xbf16>
    %21 = arith.truncf %19 : vector<128x256xf32> to vector<128x256xbf16>
    %cst_15 = arith.constant dense<0.000000e+00> : vector<1x256xf32>
    %22 = tpu.matmul %20, %21, %cst_15 {dimension_numbers = #tpu.dot_dimension_numbers<[1], [0], [0], [1], [0, 0, 1, 1], [], []>} : vector<1x128xbf16>, vector<128x256xbf16>, vector<1x256xf32> -> vector<1x256xf32>
    %c0_16 = arith.constant 0 : index
    %c0_17 = arith.constant 0 : index
    %23 = memref.load %arg8[%c0_16, %c0_17] : memref<1x1xf32, #tpu.memory_space<smem>>
    %24 = vector.broadcast %23 : f32 to vector<1x256xf32>
    %25 = arith.addf %22, %24 : vector<1x256xf32>
    %cst_18 = arith.constant 2.000000e-01 : f32
    %26 = vector.broadcast %cst_18 : f32 to vector<1x256xf32>
    %27 = arith.mulf %26, %25 : vector<1x256xf32>
    %28 = arith.maximumf %25, %27 : vector<1x256xf32>
    %29 = vector.shape_cast %28 : vector<1x256xf32> to vector<1x1x256xf32>
    %c0_19 = arith.constant 0 : index
    %c0_20 = arith.constant 0 : index
    %c0_21 = arith.constant 0 : index
    %30 = vector.load %arg9[%c0_19, %c0_20, %c0_21] : memref<1x1x256xf32, #tpu.memory_space<vmem>>, vector<1x1x256xf32>
    tpu.vector_store %arg9[%c0_19, %c0_20, %c0_21], %29 {strides = array<i32>} : memref<1x1x256xf32, #tpu.memory_space<vmem>>, vector<1x1x256xf32>,
    return
  }
  func.func @transform_0(%arg0: i32, %arg1: i32) -> (i32, i32, i32) {
    %c0_i32 = arith.constant 0 : i32
    %c0_i32_0 = arith.constant 0 : i32
    return %arg0, %c0_i32, %arg1 : i32, i32, i32
  }
  func.func @transform_1(%arg0: i32, %arg1: i32) -> (i32, i32) {
    %c0_i32 = arith.constant 0 : i32
    %c0_i32_0 = arith.constant 0 : i32
    %c0_i32_1 = arith.constant 0 : i32
    return %c0_i32, %c0_i32_0 : i32, i32
  }
  func.func @transform_2(%arg0: i32, %arg1: i32) -> (i32, i32) {
    %c0_i32 = arith.constant 0 : i32
    %c0_i32_0 = arith.constant 0 : i32
    %c0_i32_1 = arith.constant 0 : i32
    return %c0_i32, %c0_i32_0 : i32, i32
  }
  func.func @transform_3(%arg0: i32, %arg1: i32) -> (i32, i32) {
    %c0_i32 = arith.constant 0 : i32
    %c0_i32_0 = arith.constant 0 : i32
    %c0_i32_1 = arith.constant 0 : i32
    return %c0_i32, %c0_i32_0 : i32, i32
  }
  func.func @transform_4(%arg0: i32, %arg1: i32) -> (i32, i32) {
    %c0_i32 = arith.constant 0 : i32
    %c0_i32_0 = arith.constant 0 : i32
    %c0_i32_1 = arith.constant 0 : i32
    return %c0_i32, %c0_i32_0 : i32, i32
  }
  func.func @transform_5(%arg0: i32, %arg1: i32) -> (i32, i32) {
    %c0_i32 = arith.constant 0 : i32
    %c0_i32_0 = arith.constant 0 : i32
    %c0_i32_1 = arith.constant 0 : i32
    return %c0_i32, %c0_i32_0 : i32, i32
  }
  func.func @transform_6(%arg0: i32, %arg1: i32) -> (i32, i32) {
    %c0_i32 = arith.constant 0 : i32
    %c0_i32_0 = arith.constant 0 : i32
    %c0_i32_1 = arith.constant 0 : i32
    return %c0_i32, %c0_i32_0 : i32, i32
  }
  func.func @transform_7(%arg0: i32, %arg1: i32) -> (i32, i32, i32) {
    %c0_i32 = arith.constant 0 : i32
    %c0_i32_0 = arith.constant 0 : i32
    return %arg0, %c0_i32, %arg1 : i32, i32, i32
  }
}

</mosaic_0001>

<llo_original>
// kernel: tpu_custom_call.1
$region0: #{tpu_custom_call.1}
  #allocation0 [shape = 'u32[]', space=smem, size = 0x4, offset = 0x4, fixed_abs, tag = 'smem constant byte address 0x4 - core index']
  #allocation1 [shape = 'u32[72,128]{1,0:T(1,128)}', space=vmem, size = 0x9000, scoped, tag = 'internal scratch']
  #allocation2 [shape = 'f32[1,1]{1,0:T(1,128)S(6)}', space=smem, size = 0x200, scoped, tag = 'scoped memory for tpu_custom_call.1']
  %s0 = inlined_call_operand.vmem [shape: f32[2,4,256], index: 0, kind: input, shape index: {}]
  %s1 = inlined_call_operand.vmem [shape: bf16[64,4], index: 1, kind: input, shape index: {}]
  %s2 = inlined_call_operand.vmem [shape: f32[64,1], index: 2, kind: input, shape index: {}]
  %s3 = inlined_call_operand.vmem [shape: bf16[128,64], index: 3, kind: input, shape index: {}]
  %s4 = inlined_call_operand.vmem [shape: f32[128,1], index: 4, kind: input, shape index: {}]
  %s5 = inlined_call_operand.vmem [shape: bf16[1,128], index: 5, kind: input, shape index: {}]
  %s6 = inlined_call_operand.<no memory space> [shape: f32[1,1], index: 6, kind: input, shape index: {}]
  %s7 = inlined_call_operand.hbm [shape: f32[2,1,256], index: 7, kind: output, shape index: {}]
  %s8 = sld [smem:[#allocation0]]
  $region61: #{tpu_custom_call.1} parent=0
    _
  %s10 = ssub.s32 1, %s8
  %s11 = scalar_select 0, %s10, %s8
  %12 = sst [smem:[#allocation2]] %s6
  $region1: #{tpu_custom_call.1} parent=0
    #allocation3 [shape = 'u8[2048]{0}', space=vmem, size = 0x800, scoped, tag = 'output window, operand 0']
    #allocation4 [shape = 's32[2]{0}', space=sflag, size = 0x8, scoped, tag = 'scoped memory for tpu_custom_call.1']
    %13 = vsyncpa [#allocation4], 0
    %s14 = scalar_lea.sflag [#allocation4], 1
    %15 = vsyncpa %s14, 0
    loop: start=0, step=1, limit=4
    $region2: #{tpu_custom_call.1} parent=1 // loop_pre_header
      _
    $region3: #{tpu_custom_call.1} parent=1 // loop_header
      %s17 = sphi 0, %s21
      %p18 = scmp.ge.s32.totalorder %s17, 4
      %s24 = sphi 0, %s36
      %s25 = sphi 0, %s32
      %s26 = sphi 0, %s24
      %s27 = sphi 0, %s25
      %s28 = sphi 0, %s26
      %s29 = sphi 0, %s27
      %s41 = sphi 0, %s43
      %s44 = sphi 0, %s41
      %s45 = sphi 0, %s44
      %s61 = sphi 0, %s45
      %s65 = sphi 0, %s65
      %s67 = sphi 0, %s65
      %s68 = sphi 0, %s67
      %s82 = sphi 0, %s68
      %s86 = sphi 0, %s86
      %s88 = sphi 0, %s86
      %s89 = sphi 0, %s88
      %s103 = sphi 0, %s89
      %s107 = sphi 0, %s107
      %s109 = sphi 0, %s107
      %s110 = sphi 0, %s109
      %s124 = sphi 0, %s110
      %s128 = sphi 0, %s128
      %s130 = sphi 0, %s128
      %s131 = sphi 0, %s130
      %s145 = sphi 0, %s131
      %s149 = sphi 0, %s149
      %s151 = sphi 0, %s149
      %s152 = sphi 0, %s151
      %s166 = sphi 0, %s152
      %s170 = sphi 0, %s170
      %s172 = sphi 0, %s170
      %s173 = sphi 0, %s172
      %s187 = sphi 0, %s173
      %s195 = sphi 0, %s197
      %s198 = sphi 0, %s195
      %s199 = sphi 0, %s198
      %s215 = sphi 0, %s199
    $region4: #{tpu_custom_call.1} parent=1 // loop_header_branch
      %20 = sbr.rel (%p18) target = $region8
    $region5: #{tpu_custom_call.1} parent=1 // loop_body
      %s22 = ssub.s32 %s17, 1
      %s23 = ssub.s32 %s17, 2
      %s30 = sadd.s32 1, %s25
      %p31 = scmp.ge.s32.totalorder %s30, 1
      %s32 = scalar_select %p31, 0, %s30
      %s33 = sadd.s32 1, %s24
      %s34 = scalar_select %p31, %s33, %s24
      %p35 = scmp.ge.s32.totalorder %s34, 2
      %s36 = scalar_select %p35, 0, %s34
      %s37 = ssub.s32 %s24, %s36
      %s38 = ssub.s32 %s25, %s32
      %s39 = sor.u32 %s37, %s38
      %p40 = scmp.eq.s32.totalorder %s39, 0
      %s42 = sadd.s32 %s41, 1
      %s43 = scalar_select %p40, %s41, %s42
      %p46 = pneg %p40
      %p47 = scmp.eq.s32.totalorder %s17, 1
      %p48 = por %p46, %p47
      %p49 = scmp.ne.s32.totalorder %s41, %s44
      %p50 = scmp.eq.s32.totalorder %s17, 0
      %p51 = por %p49, %p50
      %p52 = scmp.ne.s32.totalorder %s41, %s44
      %p53 = scmp.eq.s32.totalorder %s22, 1
      %p54 = por %p52, %p53
      %p55 = scmp.ne.s32.totalorder %s44, %s45
      %p56 = scmp.eq.s32.totalorder %s22, 0
      %p57 = por %p55, %p56
      %p58 = scmp.ne.s32.totalorder %s44, %s45
      %p59 = scmp.eq.s32.totalorder %s23, 1
      %p60 = por %p58, %p59
      %p62 = scmp.ne.s32.totalorder %s45, %s61
      %p63 = scmp.eq.s32.totalorder %s23, 0
      %p64 = por %p62, %p63
      %s66 = sadd.s32 %s65, 1
      %p69 = scmp.eq.s32.totalorder %s17, 1
      %p70 = scmp.ne.s32.totalorder %s65, %s67
      %p71 = scmp.eq.s32.totalorder %s17, 0
      %p72 = por %p70, %p71
      %p73 = scmp.ne.s32.totalorder %s65, %s67
      %p74 = scmp.eq.s32.totalorder %s22, 1
      %p75 = por %p73, %p74
      %p76 = scmp.ne.s32.totalorder %s67, %s68
      %p77 = scmp.eq.s32.totalorder %s22, 0
      %p78 = por %p76, %p77
      %p79 = scmp.ne.s32.totalorder %s67, %s68
      %p80 = scmp.eq.s32.totalorder %s23, 1
      %p81 = por %p79, %p80
      %p83 = scmp.ne.s32.totalorder %s68, %s82
      %p84 = scmp.eq.s32.totalorder %s23, 0
      %p85 = por %p83, %p84
      %s87 = sadd.s32 %s86, 1
      %p90 = scmp.eq.s32.totalorder %s17, 1
      %p91 = scmp.ne.s32.totalorder %s86, %s88
      %p92 = scmp.eq.s32.totalorder %s17, 0
      %p93 = por %p91, %p92
      %p94 = scmp.ne.s32.totalorder %s86, %s88
      %p95 = scmp.eq.s32.totalorder %s22, 1
      %p96 = por %p94, %p95
      %p97 = scmp.ne.s32.totalorder %s88, %s89
      %p98 = scmp.eq.s32.totalorder %s22, 0
      %p99 = por %p97, %p98
      %p100 = scmp.ne.s32.totalorder %s88, %s89
      %p101 = scmp.eq.s32.totalorder %s23, 1
      %p102 = por %p100, %p101
      %p104 = scmp.ne.s32.totalorder %s89, %s103
      %p105 = scmp.eq.s32.totalorder %s23, 0
      %p106 = por %p104, %p105
      %s108 = sadd.s32 %s107, 1
      %p111 = scmp.eq.s32.totalorder %s17, 1
      %p112 = scmp.ne.s32.totalorder %s107, %s109
      %p113 = scmp.eq.s32.totalorder %s17, 0
      %p114 = por %p112, %p113
      %p115 = scmp.ne.s32.totalorder %s107, %s109
      %p116 = scmp.eq.s32.totalorder %s22, 1
      %p117 = por %p115, %p116
      %p118 = scmp.ne.s32.totalorder %s109, %s110
      %p119 = scmp.eq.s32.totalorder %s22, 0
      %p120 = por %p118, %p119
      %p121 = scmp.ne.s32.totalorder %s109, %s110
      %p122 = scmp.eq.s32.totalorder %s23, 1
      %p123 = por %p121, %p122
      %p125 = scmp.ne.s32.totalorder %s110, %s124
      %p126 = scmp.eq.s32.totalorder %s23, 0
      %p127 = por %p125, %p126
      %s129 = sadd.s32 %s128, 1
      %p132 = scmp.eq.s32.totalorder %s17, 1
      %p133 = scmp.ne.s32.totalorder %s128, %s130
      %p134 = scmp.eq.s32.totalorder %s17, 0
      %p135 = por %p133, %p134
      %p136 = scmp.ne.s32.totalorder %s128, %s130
      %p137 = scmp.eq.s32.totalorder %s22, 1
      %p138 = por %p136, %p137
      %p139 = scmp.ne.s32.totalorder %s130, %s131
      %p140 = scmp.eq.s32.totalorder %s22, 0
      %p141 = por %p139, %p140
      %p142 = scmp.ne.s32.totalorder %s130, %s131
      %p143 = scmp.eq.s32.totalorder %s23, 1
      %p144 = por %p142, %p143
      %p146 = scmp.ne.s32.totalorder %s131, %s145
      %p147 = scmp.eq.s32.totalorder %s23, 0
      %p148 = por %p146, %p147
      %s150 = sadd.s32 %s149, 1
      %p153 = scmp.eq.s32.totalorder %s17, 1
      %p154 = scmp.ne.s32.totalorder %s149, %s151
      %p155 = scmp.eq.s32.totalorder %s17, 0
      %p156 = por %p154, %p155
      %p157 = scmp.ne.s32.totalorder %s149, %s151
      %p158 = scmp.eq.s32.totalorder %s22, 1
      %p159 = por %p157, %p158
      %p160 = scmp.ne.s32.totalorder %s151, %s152
      %p161 = scmp.eq.s32.totalorder %s22, 0
      %p162 = por %p160, %p161
      %p163 = scmp.ne.s32.totalorder %s151, %s152
      %p164 = scmp.eq.s32.totalorder %s23, 1
      %p165 = por %p163, %p164
      %p167 = scmp.ne.s32.totalorder %s152, %s166
      %p168 = scmp.eq.s32.totalorder %s23, 0
      %p169 = por %p167, %p168
      %s171 = sadd.s32 %s170, 1
      %p174 = scmp.eq.s32.totalorder %s17, 1
      %p175 = scmp.ne.s32.totalorder %s170, %s172
      %p176 = scmp.eq.s32.totalorder %s17, 0
      %p177 = por %p175, %p176
      %p178 = scmp.ne.s32.totalorder %s170, %s172
      %p179 = scmp.eq.s32.totalorder %s22, 1
      %p180 = por %p178, %p179
      %p181 = scmp.ne.s32.totalorder %s172, %s173
      %p182 = scmp.eq.s32.totalorder %s22, 0
      %p183 = por %p181, %p182
      %p184 = scmp.ne.s32.totalorder %s172, %s173
      %p185 = scmp.eq.s32.totalorder %s23, 1
      %p186 = por %p184, %p185
      %p188 = scmp.ne.s32.totalorder %s173, %s187
      %p189 = scmp.eq.s32.totalorder %s23, 0
      %p190 = por %p188, %p189
      %s191 = ssub.s32 %s24, %s36
      %s192 = ssub.s32 %s25, %s32
      %s193 = sor.u32 %s191, %s192
      %p194 = scmp.eq.s32.totalorder %s193, 0
      %s196 = sadd.s32 %s195, 1
      %s197 = scalar_select %p194, %s195, %s196
      %p200 = pneg %p194
      %p201 = scmp.eq.s32.totalorder %s17, 1
      %p202 = por %p200, %p201
      %p203 = scmp.ne.s32.totalorder %s195, %s198
      %p204 = scmp.eq.s32.totalorder %s17, 0
      %p205 = por %p203, %p204
      %p206 = scmp.ne.s32.totalorder %s195, %s198
      %p207 = scmp.eq.s32.totalorder %s22, 1
      %p208 = por %p206, %p207
      %p209 = scmp.ne.s32.totalorder %s198, %s199
      %p210 = scmp.eq.s32.totalorder %s22, 0
      %p211 = por %p209, %p210
      %p212 = scmp.ne.s32.totalorder %s198, %s199
      %p213 = scmp.eq.s32.totalorder %s23, 1
      %p214 = por %p212, %p213
      %p216 = scmp.ne.s32.totalorder %s199, %s215
      %p217 = scmp.eq.s32.totalorder %s23, 0
      %p218 = por %p216, %p217
      %p219 = scmp.le.s32.totalorder 1, %s17
      %p220 = scmp.lt.s32.totalorder %s17, 3
      %p221 = pnand %p219, %p220
      %p222 = pneg %p221
      // Predicated region
      $region9: #{tpu_custom_call.1} parent=5 // pred_check
        _
      $region10: #{tpu_custom_call.1} parent=5 // pred_check_branch
        %224 = sbr.rel (%p221) target = $region12
      $region11: #{tpu_custom_call.1} parent=5 // pred_region
        %s225 = ssub.s32 %s17, 1
        // Predicated region
        $region13: #{tpu_custom_call.1} parent=11 // pred_check
          %p226 = pneg %p78
        $region14: #{tpu_custom_call.1} parent=11 // pred_check_branch
          %228 = sbr.rel (%p226) target = $region16
        $region15: #{tpu_custom_call.1} parent=11 // pred_region
          _
        $region16: #{tpu_custom_call.1} parent=11 // pred_fallthru
          _
        // Predicated region
        $region17: #{tpu_custom_call.1} parent=11 // pred_check
          %p229 = pneg %p99
        $region18: #{tpu_custom_call.1} parent=11 // pred_check_branch
          %231 = sbr.rel (%p229) target = $region20
        $region19: #{tpu_custom_call.1} parent=11 // pred_region
          _
        $region20: #{tpu_custom_call.1} parent=11 // pred_fallthru
          _
        // Predicated region
        $region21: #{tpu_custom_call.1} parent=11 // pred_check
          %p232 = pneg %p120
        $region22: #{tpu_custom_call.1} parent=11 // pred_check_branch
          %234 = sbr.rel (%p232) target = $region24
        $region23: #{tpu_custom_call.1} parent=11 // pred_region
          _
        $region24: #{tpu_custom_call.1} parent=11 // pred_fallthru
          _
        // Predicated region
        $region25: #{tpu_custom_call.1} parent=11 // pred_check
          %p235 = pneg %p141
        $region26: #{tpu_custom_call.1} parent=11 // pred_check_branch
          %237 = sbr.rel (%p235) target = $region28
        $region27: #{tpu_custom_call.1} parent=11 // pred_region
          _
        $region28: #{tpu_custom_call.1} parent=11 // pred_fallthru
          _
        // Predicated region
        $region29: #{tpu_custom_call.1} parent=11 // pred_check
          %p238 = pneg %p162
        $region30: #{tpu_custom_call.1} parent=11 // pred_check_branch
          %240 = sbr.rel (%p238) target = $region32
        $region31: #{tpu_custom_call.1} parent=11 // pred_region
          _
        $region32: #{tpu_custom_call.1} parent=11 // pred_fallthru
          _
        // Predicated region
        $region33: #{tpu_custom_call.1} parent=11 // pred_check
          %p241 = pneg %p183
        $region34: #{tpu_custom_call.1} parent=11 // pred_check_branch
          %243 = sbr.rel (%p241) target = $region36
        $region35: #{tpu_custom_call.1} parent=11 // pred_region
          _
        $region36: #{tpu_custom_call.1} parent=11 // pred_fallthru
          _
      $region12: #{tpu_custom_call.1} parent=5 // pred_fallthru
        _
      %p244 = scmp.lt.s32.totalorder %s17, 2
      // Predicated region
      $region37: #{tpu_custom_call.1} parent=5 // pred_check
        %p245 = pneg %p244
      $region38: #{tpu_custom_call.1} parent=5 // pred_check_branch
        %247 = sbr.rel (%p245) target = $region40
      $region39: #{tpu_custom_call.1} parent=5 // pred_region
        // Predicated region
        $region41: #{tpu_custom_call.1} parent=39 // pred_check
          %p248 = pneg %p51
        $region42: #{tpu_custom_call.1} parent=39 // pred_check_branch
          %250 = sbr.rel (%p248) target = $region44
        $region43: #{tpu_custom_call.1} parent=39 // pred_region
          %s251 = smul.u32 2, %s25
          %p252 = scmp.lt.s32.totalorder %s24, 1
          %s253 = scalar_select %p252, %s24, 1
          %p254 = scmp.lt.s32.totalorder %s251, 1
          %s255 = scalar_select %p254, %s251, 1
          %s256 = smul.addr %s253, 2
          %s257 = sadd.s32 %s255, %s256
          %s258 = smul.addr %s257, 4
          %s259 = scalar_lea.vmem %s0, %s258
          %s260 = smul.u32 2, %s25
        $region44: #{tpu_custom_call.1} parent=39 // pred_fallthru
          _
      $region40: #{tpu_custom_call.1} parent=5 // pred_fallthru
        _
      %p261 = scmp.le.s32.totalorder 1, %s17
      %p262 = scmp.lt.s32.totalorder %s17, 3
      %p263 = pnand %p261, %p262
      %p264 = pneg %p263
      // Predicated region
      $region45: #{tpu_custom_call.1} parent=5 // pred_check
        _
      $region46: #{tpu_custom_call.1} parent=5 // pred_check_branch
        %266 = sbr.rel (%p263) target = $region48
      $region47: #{tpu_custom_call.1} parent=5 // pred_region
        %s267 = ssub.s32 %s17, 1
        %s268 = smul.u32 2, %s27
        %p269 = scmp.lt.s32.totalorder %s26, 1
        %s270 = scalar_select %p269, %s26, 1
        %p271 = scmp.lt.s32.totalorder %s268, 1
        %s272 = scalar_select %p271, %s268, 1
        %s273 = smul.addr %s270, 2
        %s274 = sadd.s32 %s272, %s273
        %s275 = smul.addr %s274, 4
        %s276 = scalar_lea.vmem %s0, %s275
        %p277 = pneg %p57
        %p278 = pneg %p54
        %p279 = pneg %p78
        %p280 = pneg %p75
        %p281 = pneg %p99
        %p282 = pneg %p96
        %p283 = pneg %p120
        %p284 = pneg %p117
        %p285 = pneg %p141
        %p286 = pneg %p138
        %p287 = pneg %p162
        %p288 = pneg %p159
        %p289 = pneg %p183
        %p290 = pneg %p180
        %p291 = pneg %p211
        %p292 = pneg %p208
        %s293 = sand.u32 %s198, 1
        %s294 = scalar_lea.sflag [#allocation4], %s293
        %s295 = sand.u32 %s198, 1
        %s296 = smul.addr %s295, 2
        %s297 = scalar_lea.vmem [#allocation3], %s296
        %s298 = smul.u32 2, %s27
        %p299 = scmp.lt.s32.totalorder %s26, 1
        %s300 = scalar_select %p299, %s26, 1
        %p301 = scmp.lt.s32.totalorder %s298, 1
        %s302 = scalar_select %p301, %s298, 1
        %s303 = smul.addr %s300, 2
        %s304 = sadd.s32 %s302, %s303
        %s305 = smul.addr %s304, 4
        %s306 = scalar_lea.vmem %s0, %s305
        %s307 = smul.u32 2, %s27
        %s308 = smul.u32 2, %s27
        %v310 = vld [vmem:[%s306] sm:$0xff]
        %312 = vst [vmem:[#allocation1] ss:$2 sm:$0xff] %v310
        %v313 = vld.sshfl [vmem:[#allocation1] sm:$0xff pattern:$0x75316420]
        %v314 = vld.sshfl [vmem:[#allocation1 + $0x8] sm:$0xff pattern:$0x75316420]
        %v317 = vpack.c.bf16 %v313, %v313
        %v318 = vpack.c.bf16 %v314, %v314
        %v319 = vld [vmem:[%s1] sm:$0xf]
        %v320 = vld [vmem:[%s1 + $0x4] sm:$0xf]
        %v321 = vld [vmem:[%s1 + $0x8] sm:$0xf]
        %v322 = vld [vmem:[%s1 + $0xc] sm:$0xf]
        %v323 = vld [vmem:[%s1 + $0x10] sm:$0xf]
        %v324 = vld [vmem:[%s1 + $0x14] sm:$0xf]
        %v325 = vld [vmem:[%s1 + $0x18] sm:$0xf]
        %v326 = vld [vmem:[%s1 + $0x1c] sm:$0xf]
        %v327 = vld [vmem:[%s2] sm:$0xff]
        %v328 = vld [vmem:[%s2 + $0x8] sm:$0xff]
        %v329 = vld [vmem:[%s2 + $0x10] sm:$0xff]
        %v330 = vld [vmem:[%s2 + $0x18] sm:$0xff]
        %v331 = vld [vmem:[%s2 + $0x20] sm:$0xff]
        %v332 = vld [vmem:[%s2 + $0x28] sm:$0xff]
        %v333 = vld [vmem:[%s2 + $0x30] sm:$0xff]
        %v334 = vld [vmem:[%s2 + $0x38] sm:$0xff]
        %336 = vset.pattern.permute.xlu0 0
        %337 = vperm.xlu0 %336, %v327
        %v338 = vpop.permute.xlu0 %337
        %341 = vset.pattern.permute.xlu0 0
        %342 = vperm.xlu0 %341, %v328
        %v343 = vpop.permute.xlu0 %342
        %346 = vset.pattern.permute.xlu0 0
        %347 = vperm.xlu0 %346, %v329
        %v348 = vpop.permute.xlu0 %347
        %351 = vset.pattern.permute.xlu0 0
        %352 = vperm.xlu0 %351, %v330
        %v353 = vpop.permute.xlu0 %352
        %356 = vset.pattern.permute.xlu0 0
        %357 = vperm.xlu0 %356, %v331
        %v358 = vpop.permute.xlu0 %357
        %361 = vset.pattern.permute.xlu0 0
        %362 = vperm.xlu0 %361, %v332
        %v363 = vpop.permute.xlu0 %362
        %366 = vset.pattern.permute.xlu0 0
        %367 = vperm.xlu0 %366, %v333
        %v368 = vpop.permute.xlu0 %367
        %371 = vset.pattern.permute.xlu0 0
        %372 = vperm.xlu0 %371, %v334
        %v373 = vpop.permute.xlu0 %372
        %v383 = vunpack.c.l.b16 %v319
        %v384 = vunpack.c.l.b16 %v320
        %v385 = vunpack.c.l.b16 %v321
        %v386 = vunpack.c.l.b16 %v322
        %v387 = vunpack.c.l.b16 %v323
        %v388 = vunpack.c.l.b16 %v324
        %v389 = vunpack.c.l.b16 %v325
        %v390 = vunpack.c.l.b16 %v326
        %v391 = vpack.c.b16 %v384, %v383
        %v392 = vpack.c.b16 %v386, %v385
        %v393 = vpack.c.b16 %v388, %v387
        %v394 = vpack.c.b16 %v390, %v389
        %vm395 = vcmask 31744
        %v397 = vsel %vm395, %v391, 0
        %v400 = vsel %vm395, %v392, 0
        %v403 = vsel %vm395, %v393, 0
        %v406 = vsel %vm395, %v394, 0
        %vm408 = vcmask 1041408
        %v410 = vsel %vm408, %v317, 0
        %v413 = vsel %vm408, %v318, 0
        %415 = vmatpush.bf16.msra.mxu0 0
        %416 = vmatpush.bf16.msra.mxu0 0
        %417 = vmatpush.bf16.msra.mxu0 0
        %418 = vmatpush.bf16.msra.mxu0 0
        %419 = vmatpush.bf16.msra.mxu0 0
        %420 = vmatpush.bf16.msra.mxu0 0
        %421 = vmatpush.bf16.msra.mxu0 0
        %422 = vmatpush.bf16.msra.mxu0 %v410
        %423 = vmatmul.bf16.gmra.mxu0 %v397
        %v424 = vpop.f32.mrf.mxu0
        %v425 = vadd.f32 %v338, %v424
        %v426 = vpop.f32.mrf.mxu0
        %v427 = vadd.f32 %v343, %v426
        %428 = vmatmul.bf16.gmra.mxu0 %v400
        %v429 = vpop.f32.mrf.mxu0
        %v430 = vadd.f32 %v348, %v429
        %v431 = vpop.f32.mrf.mxu0
        %v432 = vadd.f32 %v353, %v431
        %433 = vmatmul.bf16.gmra.mxu0 %v403
        %v434 = vpop.f32.mrf.mxu0
        %v435 = vadd.f32 %v358, %v434
        %v436 = vpop.f32.mrf.mxu0
        %v437 = vadd.f32 %v363, %v436
        %438 = vmatmul.bf16.gmra.mxu0 %v406
        %v439 = vpop.f32.mrf.mxu0
        %v440 = vadd.f32 %v368, %v439
        %v441 = vpop.f32.mrf.mxu0
        %v442 = vadd.f32 %v373, %v441
        %443 = vdwg.mxu0
        %444 = vmatpush.bf16.msra.mxu0 0
        %445 = vmatpush.bf16.msra.mxu0 0
        %446 = vmatpush.bf16.msra.mxu0 0
        %447 = vmatpush.bf16.msra.mxu0 0
        %448 = vmatpush.bf16.msra.mxu0 0
        %449 = vmatpush.bf16.msra.mxu0 0
        %450 = vmatpush.bf16.msra.mxu0 0
        %451 = vmatpush.bf16.msra.mxu0 %v413
        %452 = vmatmul.bf16.gmra.mxu0 %v397
        %v453 = vpop.f32.mrf.mxu0
        %v454 = vadd.f32 %v338, %v453
        %v455 = vpop.f32.mrf.mxu0
        %v456 = vadd.f32 %v343, %v455
        %457 = vmatmul.bf16.gmra.mxu0 %v400
        %v458 = vpop.f32.mrf.mxu0
        %v459 = vadd.f32 %v348, %v458
        %v460 = vpop.f32.mrf.mxu0
        %v461 = vadd.f32 %v353, %v460
        %462 = vmatmul.bf16.gmra.mxu0 %v403
        %v463 = vpop.f32.mrf.mxu0
        %v464 = vadd.f32 %v358, %v463
        %v465 = vpop.f32.mrf.mxu0
        %v466 = vadd.f32 %v363, %v465
        %467 = vmatmul.bf16.gmra.mxu0 %v406
        %v468 = vpop.f32.mrf.mxu0
        %v469 = vadd.f32 %v368, %v468
        %v470 = vpop.f32.mrf.mxu0
        %v471 = vadd.f32 %v373, %v470
        %472 = vdwg.mxu0
        %v473 = vmul.f32 %v425, 0.2
        %v474 = vmul.f32 %v454, 0.2
        %v475 = vmul.f32 %v427, 0.2
        %v476 = vmul.f32 %v456, 0.2
        %v477 = vmul.f32 %v430, 0.2
        %v478 = vmul.f32 %v459, 0.2
        %v479 = vmul.f32 %v432, 0.2
        %v480 = vmul.f32 %v461, 0.2
        %v481 = vmul.f32 %v435, 0.2
        %v482 = vmul.f32 %v464, 0.2
        %v483 = vmul.f32 %v437, 0.2
        %v484 = vmul.f32 %v466, 0.2
        %v485 = vmul.f32 %v440, 0.2
        %v486 = vmul.f32 %v469, 0.2
        %v487 = vmul.f32 %v442, 0.2
        %v488 = vmul.f32 %v471, 0.2
        %v489 = vmax.f32 %v425, %v473
        %v490 = vmax.f32 %v454, %v474
        %v491 = vmax.f32 %v427, %v475
        %v492 = vmax.f32 %v456, %v476
        %v493 = vmax.f32 %v430, %v477
        %v494 = vmax.f32 %v459, %v478
        %v495 = vmax.f32 %v432, %v479
        %v496 = vmax.f32 %v461, %v480
        %v497 = vmax.f32 %v435, %v481
        %v498 = vmax.f32 %v464, %v482
        %v499 = vmax.f32 %v437, %v483
        %v500 = vmax.f32 %v466, %v484
        %v501 = vmax.f32 %v440, %v485
        %v502 = vmax.f32 %v469, %v486
        %v503 = vmax.f32 %v442, %v487
        %v504 = vmax.f32 %v471, %v488
        %v505 = vld [vmem:[%s3] sm:$0xf]
        %v506 = vld [vmem:[%s3 + $0x4] sm:$0xf]
        %v507 = vld [vmem:[%s3 + $0x8] sm:$0xf]
        %v508 = vld [vmem:[%s3 + $0xc] sm:$0xf]
        %v509 = vld [vmem:[%s3 + $0x10] sm:$0xf]
        %v510 = vld [vmem:[%s3 + $0x14] sm:$0xf]
        %v511 = vld [vmem:[%s3 + $0x18] sm:$0xf]
        %v512 = vld [vmem:[%s3 + $0x1c] sm:$0xf]
        %v513 = vld [vmem:[%s3 + $0x20] sm:$0xf]
        %v514 = vld [vmem:[%s3 + $0x24] sm:$0xf]
        %v515 = vld [vmem:[%s3 + $0x28] sm:$0xf]
        %v516 = vld [vmem:[%s3 + $0x2c] sm:$0xf]
        %v517 = vld [vmem:[%s3 + $0x30] sm:$0xf]
        %v518 = vld [vmem:[%s3 + $0x34] sm:$0xf]
        %v519 = vld [vmem:[%s3 + $0x38] sm:$0xf]
        %v520 = vld [vmem:[%s3 + $0x3c] sm:$0xf]
        %v521 = vpack.c.bf16 %v491, %v489
        %v522 = vpack.c.bf16 %v492, %v490
        %v523 = vpack.c.bf16 %v495, %v493
        %v524 = vpack.c.bf16 %v496, %v494
        %v525 = vpack.c.bf16 %v499, %v497
        %v526 = vpack.c.bf16 %v500, %v498
        %v527 = vpack.c.bf16 %v503, %v501
        %v528 = vpack.c.bf16 %v504, %v502
        %v529 = vld [vmem:[%s4] sm:$0xff]
        %v530 = vld [vmem:[%s4 + $0x8] sm:$0xff]
        %v531 = vld [vmem:[%s4 + $0x10] sm:$0xff]
        %v532 = vld [vmem:[%s4 + $0x18] sm:$0xff]
        %v533 = vld [vmem:[%s4 + $0x20] sm:$0xff]
        %v534 = vld [vmem:[%s4 + $0x28] sm:$0xff]
        %v535 = vld [vmem:[%s4 + $0x30] sm:$0xff]
        %v536 = vld [vmem:[%s4 + $0x38] sm:$0xff]
        %v537 = vld [vmem:[%s4 + $0x40] sm:$0xff]
        %v538 = vld [vmem:[%s4 + $0x48] sm:$0xff]
        %v539 = vld [vmem:[%s4 + $0x50] sm:$0xff]
        %v540 = vld [vmem:[%s4 + $0x58] sm:$0xff]
        %v541 = vld [vmem:[%s4 + $0x60] sm:$0xff]
        %v542 = vld [vmem:[%s4 + $0x68] sm:$0xff]
        %v543 = vld [vmem:[%s4 + $0x70] sm:$0xff]
        %v544 = vld [vmem:[%s4 + $0x78] sm:$0xff]
        %546 = vset.pattern.permute.xlu0 0
        %547 = vperm.xlu0 %546, %v529
        %v548 = vpop.permute.xlu0 %547
        %551 = vset.pattern.permute.xlu0 0
        %552 = vperm.xlu0 %551, %v530
        %v553 = vpop.permute.xlu0 %552
        %556 = vset.pattern.permute.xlu0 0
        %557 = vperm.xlu0 %556, %v531
        %v558 = vpop.permute.xlu0 %557
        %561 = vset.pattern.permute.xlu0 0
        %562 = vperm.xlu0 %561, %v532
        %v563 = vpop.permute.xlu0 %562
        %566 = vset.pattern.permute.xlu0 0
        %567 = vperm.xlu0 %566, %v533
        %v568 = vpop.permute.xlu0 %567
        %571 = vset.pattern.permute.xlu0 0
        %572 = vperm.xlu0 %571, %v534
        %v573 = vpop.permute.xlu0 %572
        %576 = vset.pattern.permute.xlu0 0
        %577 = vperm.xlu0 %576, %v535
        %v578 = vpop.permute.xlu0 %577
        %581 = vset.pattern.permute.xlu0 0
        %582 = vperm.xlu0 %581, %v536
        %v583 = vpop.permute.xlu0 %582
        %586 = vset.pattern.permute.xlu0 0
        %587 = vperm.xlu0 %586, %v537
        %v588 = vpop.permute.xlu0 %587
        %591 = vset.pattern.permute.xlu0 0
        %592 = vperm.xlu0 %591, %v538
        %v593 = vpop.permute.xlu0 %592
        %596 = vset.pattern.permute.xlu0 0
        %597 = vperm.xlu0 %596, %v539
        %v598 = vpop.permute.xlu0 %597
        %601 = vset.pattern.permute.xlu0 0
        %602 = vperm.xlu0 %601, %v540
        %v603 = vpop.permute.xlu0 %602
        %606 = vset.pattern.permute.xlu0 0
        %607 = vperm.xlu0 %606, %v541
        %v608 = vpop.permute.xlu0 %607
        %611 = vset.pattern.permute.xlu0 0
        %612 = vperm.xlu0 %611, %v542
        %v613 = vpop.permute.xlu0 %612
        %616 = vset.pattern.permute.xlu0 0
        %617 = vperm.xlu0 %616, %v543
        %v618 = vpop.permute.xlu0 %617
        %621 = vset.pattern.permute.xlu0 0
        %622 = vperm.xlu0 %621, %v544
        %v623 = vpop.permute.xlu0 %622
        %v641 = vunpack.c.l.b16 %v505
        %v642 = vunpack.c.l.b16 %v506
        %v643 = vunpack.c.l.b16 %v507
        %v644 = vunpack.c.l.b16 %v508
        %v645 = vunpack.c.l.b16 %v509
        %v646 = vunpack.c.l.b16 %v510
        %v647 = vunpack.c.l.b16 %v511
        %v648 = vunpack.c.l.b16 %v512
        %v649 = vunpack.c.l.b16 %v513
        %v650 = vunpack.c.l.b16 %v514
        %v651 = vunpack.c.l.b16 %v515
        %v652 = vunpack.c.l.b16 %v516
        %v653 = vunpack.c.l.b16 %v517
        %v654 = vunpack.c.l.b16 %v518
        %v655 = vunpack.c.l.b16 %v519
        %v656 = vunpack.c.l.b16 %v520
        %v657 = vpack.c.b16 %v642, %v641
        %v658 = vpack.c.b16 %v644, %v643
        %v659 = vpack.c.b16 %v646, %v645
        %v660 = vpack.c.b16 %v648, %v647
        %v661 = vpack.c.b16 %v650, %v649
        %v662 = vpack.c.b16 %v652, %v651
        %v663 = vpack.c.b16 %v654, %v653
        %v664 = vpack.c.b16 %v656, %v655
        %vm665 = vcmask 523264
        %v667 = vsel %vm665, %v657, 0
        %v670 = vsel %vm665, %v658, 0
        %v673 = vsel %vm665, %v659, 0
        %v676 = vsel %vm665, %v660, 0
        %v679 = vsel %vm665, %v661, 0
        %v682 = vsel %vm665, %v662, 0
        %v685 = vsel %vm665, %v663, 0
        %v688 = vsel %vm665, %v664, 0
        %690 = vmatpush.bf16.msra.mxu0 0
        %691 = vmatpush.bf16.msra.mxu0 0
        %692 = vmatpush.bf16.msra.mxu0 0
        %693 = vmatpush.bf16.msra.mxu0 0
        %694 = vmatpush.bf16.msra.mxu0 %v527
        %695 = vmatpush.bf16.msra.mxu0 %v525
        %696 = vmatpush.bf16.msra.mxu0 %v523
        %697 = vmatpush.bf16.msra.mxu0 %v521
        %698 = vmatmul.bf16.gmra.mxu0 %v667
        %v699 = vpop.f32.mrf.mxu0
        %v700 = vadd.f32 %v548, %v699
        %v701 = vpop.f32.mrf.mxu0
        %v702 = vadd.f32 %v553, %v701
        %703 = vmatmul.bf16.gmra.mxu0 %v670
        %v704 = vpop.f32.mrf.mxu0
        %v705 = vadd.f32 %v558, %v704
        %v706 = vpop.f32.mrf.mxu0
        %v707 = vadd.f32 %v563, %v706
        %708 = vmatmul.bf16.gmra.mxu0 %v673
        %v709 = vpop.f32.mrf.mxu0
        %v710 = vadd.f32 %v568, %v709
        %v711 = vpop.f32.mrf.mxu0
        %v712 = vadd.f32 %v573, %v711
        %713 = vmatmul.bf16.gmra.mxu0 %v676
        %v714 = vpop.f32.mrf.mxu0
        %v715 = vadd.f32 %v578, %v714
        %v716 = vpop.f32.mrf.mxu0
        %v717 = vadd.f32 %v583, %v716
        %718 = vmatmul.bf16.gmra.mxu0 %v679
        %v719 = vpop.f32.mrf.mxu0
        %v720 = vadd.f32 %v588, %v719
        %v721 = vpop.f32.mrf.mxu0
        %v722 = vadd.f32 %v593, %v721
        %723 = vmatmul.bf16.gmra.mxu0 %v682
        %v724 = vpop.f32.mrf.mxu0
        %v725 = vadd.f32 %v598, %v724
        %v726 = vpop.f32.mrf.mxu0
        %v727 = vadd.f32 %v603, %v726
        %728 = vmatmul.bf16.gmra.mxu0 %v685
        %v729 = vpop.f32.mrf.mxu0
        %v730 = vadd.f32 %v608, %v729
        %v731 = vpop.f32.mrf.mxu0
        %v732 = vadd.f32 %v613, %v731
        %733 = vmatmul.bf16.gmra.mxu0 %v688
        %v734 = vpop.f32.mrf.mxu0
        %v735 = vadd.f32 %v618, %v734
        %v736 = vpop.f32.mrf.mxu0
        %v737 = vadd.f32 %v623, %v736
        %738 = vdwg.mxu0
        %739 = vmatpush.bf16.msra.mxu0 0
        %740 = vmatpush.bf16.msra.mxu0 0
        %741 = vmatpush.bf16.msra.mxu0 0
        %742 = vmatpush.bf16.msra.mxu0 0
        %743 = vmatpush.bf16.msra.mxu0 %v528
        %744 = vmatpush.bf16.msra.mxu0 %v526
        %745 = vmatpush.bf16.msra.mxu0 %v524
        %746 = vmatpush.bf16.msra.mxu0 %v522
        %747 = vmatmul.bf16.gmra.mxu0 %v667
        %v748 = vpop.f32.mrf.mxu0
        %v749 = vadd.f32 %v548, %v748
        %v750 = vpop.f32.mrf.mxu0
        %v751 = vadd.f32 %v553, %v750
        %752 = vmatmul.bf16.gmra.mxu0 %v670
        %v753 = vpop.f32.mrf.mxu0
        %v754 = vadd.f32 %v558, %v753
        %v755 = vpop.f32.mrf.mxu0
        %v756 = vadd.f32 %v563, %v755
        %757 = vmatmul.bf16.gmra.mxu0 %v673
        %v758 = vpop.f32.mrf.mxu0
        %v759 = vadd.f32 %v568, %v758
        %v760 = vpop.f32.mrf.mxu0
        %v761 = vadd.f32 %v573, %v760
        %762 = vmatmul.bf16.gmra.mxu0 %v676
        %v763 = vpop.f32.mrf.mxu0
        %v764 = vadd.f32 %v578, %v763
        %v765 = vpop.f32.mrf.mxu0
        %v766 = vadd.f32 %v583, %v765
        %767 = vmatmul.bf16.gmra.mxu0 %v679
        %v768 = vpop.f32.mrf.mxu0
        %v769 = vadd.f32 %v588, %v768
        %v770 = vpop.f32.mrf.mxu0
        %v771 = vadd.f32 %v593, %v770
        %772 = vmatmul.bf16.gmra.mxu0 %v682
        %v773 = vpop.f32.mrf.mxu0
        %v774 = vadd.f32 %v598, %v773
        %v775 = vpop.f32.mrf.mxu0
        %v776 = vadd.f32 %v603, %v775
        %777 = vmatmul.bf16.gmra.mxu0 %v685
        %v778 = vpop.f32.mrf.mxu0
        %v779 = vadd.f32 %v608, %v778
        %v780 = vpop.f32.mrf.mxu0
        %v781 = vadd.f32 %v613, %v780
        %782 = vmatmul.bf16.gmra.mxu0 %v688
        %v783 = vpop.f32.mrf.mxu0
        %v784 = vadd.f32 %v618, %v783
        %v785 = vpop.f32.mrf.mxu0
        %v786 = vadd.f32 %v623, %v785
        %787 = vdwg.mxu0
        %v788 = vmul.f32 %v700, 0.2
        %v789 = vmul.f32 %v749, 0.2
        %v790 = vmul.f32 %v702, 0.2
        %v791 = vmul.f32 %v751, 0.2
        %v792 = vmul.f32 %v705, 0.2
        %v793 = vmul.f32 %v754, 0.2
        %v794 = vmul.f32 %v707, 0.2
        %v795 = vmul.f32 %v756, 0.2
        %v796 = vmul.f32 %v710, 0.2
        %v797 = vmul.f32 %v759, 0.2
        %v798 = vmul.f32 %v712, 0.2
        %v799 = vmul.f32 %v761, 0.2
        %v800 = vmul.f32 %v715, 0.2
        %v801 = vmul.f32 %v764, 0.2
        %v802 = vmul.f32 %v717, 0.2
        %v803 = vmul.f32 %v766, 0.2
        %v804 = vmul.f32 %v720, 0.2
        %v805 = vmul.f32 %v769, 0.2
        %v806 = vmul.f32 %v722, 0.2
        %v807 = vmul.f32 %v771, 0.2
        %v808 = vmul.f32 %v725, 0.2
        %v809 = vmul.f32 %v774, 0.2
        %v810 = vmul.f32 %v727, 0.2
        %v811 = vmul.f32 %v776, 0.2
        %v812 = vmul.f32 %v730, 0.2
        %v813 = vmul.f32 %v779, 0.2
        %v814 = vmul.f32 %v732, 0.2
        %v815 = vmul.f32 %v781, 0.2
        %v816 = vmul.f32 %v735, 0.2
        %v817 = vmul.f32 %v784, 0.2
        %v818 = vmul.f32 %v737, 0.2
        %v819 = vmul.f32 %v786, 0.2
        %v820 = vmax.f32 %v700, %v788
        %v821 = vmax.f32 %v749, %v789
        %v822 = vmax.f32 %v702, %v790
        %v823 = vmax.f32 %v751, %v791
        %v824 = vmax.f32 %v705, %v792
        %v825 = vmax.f32 %v754, %v793
        %v826 = vmax.f32 %v707, %v794
        %v827 = vmax.f32 %v756, %v795
        %v828 = vmax.f32 %v710, %v796
        %v829 = vmax.f32 %v759, %v797
        %v830 = vmax.f32 %v712, %v798
        %v831 = vmax.f32 %v761, %v799
        %v832 = vmax.f32 %v715, %v800
        %v833 = vmax.f32 %v764, %v801
        %v834 = vmax.f32 %v717, %v802
        %v835 = vmax.f32 %v766, %v803
        %v836 = vmax.f32 %v720, %v804
        %v837 = vmax.f32 %v769, %v805
        %v838 = vmax.f32 %v722, %v806
        %v839 = vmax.f32 %v771, %v807
        %v840 = vmax.f32 %v725, %v808
        %v841 = vmax.f32 %v774, %v809
        %v842 = vmax.f32 %v727, %v810
        %v843 = vmax.f32 %v776, %v811
        %v844 = vmax.f32 %v730, %v812
        %v845 = vmax.f32 %v779, %v813
        %v846 = vmax.f32 %v732, %v814
        %v847 = vmax.f32 %v781, %v815
        %v848 = vmax.f32 %v735, %v816
        %v849 = vmax.f32 %v784, %v817
        %v850 = vmax.f32 %v737, %v818
        %v851 = vmax.f32 %v786, %v819
        %v852 = vld [vmem:[%s5] sm:$0x1]
        %v853 = vpack.c.bf16 %v822, %v820
        %v854 = vpack.c.bf16 %v823, %v821
        %v855 = vpack.c.bf16 %v826, %v824
        %v856 = vpack.c.bf16 %v827, %v825
        %v857 = vpack.c.bf16 %v830, %v828
        %v858 = vpack.c.bf16 %v831, %v829
        %v859 = vpack.c.bf16 %v834, %v832
        %v860 = vpack.c.bf16 %v835, %v833
        %v861 = vpack.c.bf16 %v838, %v836
        %v862 = vpack.c.bf16 %v839, %v837
        %v863 = vpack.c.bf16 %v842, %v840
        %v864 = vpack.c.bf16 %v843, %v841
        %v865 = vpack.c.bf16 %v846, %v844
        %v866 = vpack.c.bf16 %v847, %v845
        %v867 = vpack.c.bf16 %v850, %v848
        %v868 = vpack.c.bf16 %v851, %v849
        %s869 = sld [smem:[#allocation2]]
        %v870 = vstv %s869
        %871 = vmatpush.bf16.msra.mxu0 %v867
        %872 = vmatpush.bf16.msra.mxu0 %v865
        %873 = vmatpush.bf16.msra.mxu0 %v863
        %874 = vmatpush.bf16.msra.mxu0 %v861
        %875 = vmatpush.bf16.msra.mxu0 %v859
        %876 = vmatpush.bf16.msra.mxu0 %v857
        %877 = vmatpush.bf16.msra.mxu0 %v855
        %878 = vmatpush.bf16.msra.mxu0 %v853
        %879 = vmatmul.bf16.gmra.mxu0 %v852
        %v880 = vpop.f32.mrf.mxu0
        %v881 = vadd.f32 %v870, %v880
        %v882 = vpop.f32.mrf.mxu0
        %883 = vdwg.mxu0
        %884 = vmatpush.bf16.msra.mxu0 %v868
        %885 = vmatpush.bf16.msra.mxu0 %v866
        %886 = vmatpush.bf16.msra.mxu0 %v864
        %887 = vmatpush.bf16.msra.mxu0 %v862
        %888 = vmatpush.bf16.msra.mxu0 %v860
        %889 = vmatpush.bf16.msra.mxu0 %v858
        %890 = vmatpush.bf16.msra.mxu0 %v856
        %891 = vmatpush.bf16.msra.mxu0 %v854
        %892 = vmatmul.bf16.gmra.mxu0 %v852
        %v893 = vpop.f32.mrf.mxu0
        %v894 = vadd.f32 %v870, %v893
        %v895 = vpop.f32.mrf.mxu0
        %896 = vdwg.mxu0
        %v897 = vmul.f32 %v881, 0.2
        %v898 = vmul.f32 %v894, 0.2
        %v899 = vmax.f32 %v881, %v897
        %v900 = vmax.f32 %v894, %v898
        %v903 = vrot.slane %v900, 7
        %vm904 = vcmask 1040384
        %v905 = vsel %vm904, %v899, %v903
        %v907 = vlaneseq
        %vm908 = vcmp.ge.s32.totalorder %v907, 0
        %vm909 = vcmp.lt.s32.totalorder %v907, 256
        %vm910 = vmand %vm908, %vm909
        %911 = vst.msk [vmem:[%s297] sm:$0x3] %vm910, %v905
        %s912 = sand.u32 %s198, 1
        %s913 = scalar_lea.sflag [#allocation4], %s912
        %s914 = sand.u32 %s198, 1
        %s915 = smul.addr %s914, 2
        %s916 = scalar_lea.vmem [#allocation3], %s915
        // Predicated region
        $region49: #{tpu_custom_call.1} parent=47 // pred_check
          %p917 = pneg %p208
        $region50: #{tpu_custom_call.1} parent=47 // pred_check_branch
          %919 = sbr.rel (%p917) target = $region52
        $region51: #{tpu_custom_call.1} parent=47 // pred_region
          %s920 = smul.u32 2, %s27
          %922 = vsyncadd %s913, 0
          %s923 = smul.addr %s26, 2
          %s924 = sadd.s32 %s920, %s923
          %s925 = scalar_lea.hbm %s7, %s924
          %s927 = sshll.u32 %s916, 4
          %s928 = int_to_ptr.vmem [resolvable:$true] %s927
          %s929 = sshll.u32 %s925, 4
          %s930 = int_to_ptr.hbm [resolvable:$true] %s929
          %932 = dma.vmem_to_hbm [thread:$0]  %s928, 32, %s930, %s913
        $region52: #{tpu_custom_call.1} parent=47 // pred_fallthru
          _
      $region48: #{tpu_custom_call.1} parent=5 // pred_fallthru
        _
      %p933 = scmp.le.s32.totalorder 2, %s17
      // Predicated region
      $region53: #{tpu_custom_call.1} parent=5 // pred_check
        %p934 = pneg %p933
      $region54: #{tpu_custom_call.1} parent=5 // pred_check_branch
        %936 = sbr.rel (%p934) target = $region56
      $region55: #{tpu_custom_call.1} parent=5 // pred_region
        %s937 = ssub.s32 %s17, 2
        // Predicated region
        $region57: #{tpu_custom_call.1} parent=55 // pred_check
          %p938 = pneg %p214
        $region58: #{tpu_custom_call.1} parent=55 // pred_check_branch
          %940 = sbr.rel (%p938) target = $region60
        $region59: #{tpu_custom_call.1} parent=55 // pred_region
          %s941 = sand.u32 %s199, 1
          %s942 = scalar_lea.sflag [#allocation4], %s941
          %s943 = sand.u32 %s199, 1
          %s944 = smul.addr %s943, 2
          %s945 = scalar_lea.vmem [#allocation3], %s944
          %947 = dma.done %s942, 32
        $region60: #{tpu_custom_call.1} parent=55 // pred_fallthru
          _
      $region56: #{tpu_custom_call.1} parent=5 // pred_fallthru
        _
    $region6: #{tpu_custom_call.1} parent=1 // loop_footer
      %s21 = sadd.s32 1, %s17
    $region7: #{tpu_custom_call.1} parent=1 // loop_footer_branch
      %16 = sbr.rel target = $region3
    $region8: #{tpu_custom_call.1} parent=1 // loop_exit
      _
    %948 = vsyncpa [#allocation4], 1
    %s949 = scalar_lea.sflag [#allocation4], 1
    %950 = vsyncpa %s949, 1

</llo_original>
